<compile_context>
chip_gen: v7x
topology: tpu7x:2x2x1
jax: 0.10.0
libtpu: 0.0.40
codegen_flags: <defaults>
</compile_context>

<pallas_src>
import functools

import jax
import jax.numpy as jnp
from jax.experimental import pallas as pl
from jax.experimental.pallas import tpu as pltpu


def _round_up(v, m):
    return ((v + m - 1) // m) * m


def _focal_loss_kernel(x_ref, t_ref, loss_ref, acc_ref, *, gamma, total_pixels):
    # x_ref: (1, C, T) logits      t_ref: (1, 1, T) int32 targets (-1 == padding)
    # loss_ref: (1, 1) f32 output  acc_ref: (1, 1) f32 running sum of per-pixel CE
    n, j = pl.program_id(0), pl.program_id(1)
    is_first = jnp.logical_and(n == 0, j == 0)
    is_last = jnp.logical_and(n == pl.num_programs(0) - 1,
                              j == pl.num_programs(1) - 1)

    x = x_ref[0].astype(jnp.float32)          # (C, T): classes on sublanes, pixels on lanes
    t = t_ref[0]                              # (1, T) int32
    C, T = x.shape

    # numerically stable log-sum-exp over the class (sublane) axis
    m = jnp.max(x, axis=0, keepdims=True)                                   # (1, T)
    lse = m + jnp.log(jnp.sum(jnp.exp(x - m), axis=0, keepdims=True))       # (1, T)

    # gather x[t_p, p] without a transpose: one-hot select over sublanes (int compare)
    cls = jax.lax.broadcasted_iota(jnp.int32, (C, T), 0)
    x_t = jnp.sum(jnp.where(cls == t, x, 0.0), axis=0, keepdims=True)       # (1, T)

    valid = (t >= 0).astype(jnp.float32)                                    # (1, T)
    ce = (lse - x_t) * valid                                                # (1, T)

    @pl.when(is_first)
    def _():
        acc_ref[...] = jnp.zeros_like(acc_ref)

    acc_ref[...] += jnp.sum(ce, keepdims=True)            # (1, 1) running CE sum

    @pl.when(is_last)
    def _():
        ce_mean = acc_ref[...] / float(total_pixels)      # == -logpt (scalar mean CE)
        if gamma == 0:                                    # static branch: (1-pt)**0 == 1
            loss = ce_mean
        else:
            pt = jnp.exp(-ce_mean)
            loss = ((1.0 - pt) ** gamma) * ce_mean
        loss_ref[...] = loss


def focal_loss_2d(inputs_nchw, targets, gamma=0, max_tile=2048):
    """Pallas equivalent of FocalLoss2d(gamma, weight=None, size_average=True, logit=False)."""
    N, C, H, W = inputs_nchw.shape
    hw = H * W
    P = N * hw

    # native layout -- free reshapes only, no HBM transpose
    x = inputs_nchw.reshape(N, C, hw)
    t = targets.reshape(N, 1, hw).astype(jnp.int32)

    # pad pixel (lane) axis to a tile multiple; padded pixels are marked with -1
    tile = min(max_tile, _round_up(hw, 128))
    hw_pad = _round_up(hw, tile)
    if hw_pad != hw:
        x = jnp.pad(x, ((0, 0), (0, 0), (0, hw_pad - hw)))
        t = jnp.pad(t, ((0, 0), (0, 0), (0, hw_pad - hw)), constant_values=-1)

    grid = (N, hw_pad // tile)
    kernel = functools.partial(_focal_loss_kernel, gamma=gamma, total_pixels=P)

    itemsize = jnp.dtype(inputs_nchw.dtype).itemsize
    cost = pl.CostEstimate(
        flops=int(8 * P * C),
        transcendentals=int(P * C + P),
        bytes_accessed=int(P * C * itemsize + P * 4 + 4),
    )

    loss = pl.pallas_call(
        kernel,
        out_shape=jax.ShapeDtypeStruct((1, 1), jnp.float32),
        grid_spec=pltpu.PrefetchScalarGridSpec(
            num_scalar_prefetch=0,
            grid=grid,
            in_specs=[
                pl.BlockSpec((1, C, tile), lambda n, j: (n, 0, j)),   # logits block
                pl.BlockSpec((1, 1, tile), lambda n, j: (n, 0, j)),   # targets block
            ],
            out_specs=pl.BlockSpec((1, 1), lambda n, j: (0, 0)),      # resident scalar out
            scratch_shapes=[pltpu.VMEM((1, 1), jnp.float32)],         # CE-sum accumulator
        ),
        compiler_params=pltpu.CompilerParams(
            dimension_semantics=("arbitrary", "arbitrary")),
        cost_estimate=cost,
    )(x, t)
    return loss[0, 0]


def _reference_focal_loss(inputs_nchw, targets, gamma=0):
    """Pure-JAX mirror of the PyTorch forward (logit=False, weight=None)."""
    N, C, H, W = inputs_nchw.shape
    x = jnp.transpose(inputs_nchw, (0, 2, 3, 1)).reshape(-1, C).astype(jnp.float32)
    t = targets.reshape(-1).astype(jnp.int32)
    logp = jax.nn.log_softmax(x, axis=-1)
    ce = -jnp.take_along_axis(logp, t[:, None], axis=-1)[:, 0]
    ce_mean = jnp.mean(ce)                    # F.cross_entropy(..., reduction='mean')
    logpt = -ce_mean
    pt = jnp.exp(logpt)
    return -((1.0 - pt) ** gamma) * logpt     # .mean() of a scalar is itself


if __name__ == "__main__":
    N, C, H, W = 2, 4, 16, 16

    key = jax.random.PRNGKey(0)
    k_in, k_tgt = jax.random.split(key)
    inputs = jax.random.normal(k_in, (N, C, H, W), dtype=jnp.float32)
    targets = jax.random.randint(k_tgt, (N, H, W), 0, C, dtype=jnp.int32)

    # default FocalLoss2d (gamma=0) and a gamma-modulated variant
    loss0 = jax.block_until_ready(focal_loss_2d(inputs, targets, gamma=0))
    loss2 = jax.block_until_ready(focal_loss_2d(inputs, targets, gamma=2))

    ref0 = jax.block_until_ready(_reference_focal_loss(inputs, targets, gamma=0))
    ref2 = jax.block_until_ready(_reference_focal_loss(inputs, targets, gamma=2))

    assert jnp.allclose(loss0, ref0, atol=1e-5, rtol=1e-5), (loss0, ref0)
    assert jnp.allclose(loss2, ref2, atol=1e-5, rtol=1e-5), (loss2, ref2)

    print("KERNEL_OK")
</pallas_src>

<mosaic_0001>
module attributes {stable_mosaic.version = 11 : i64} {
  func.func @_focal_loss_kernel(%arg0: i32, %arg1: i32, %arg2: memref<1x4x256xf32, #tpu.memory_space<vmem>>, %arg3: memref<1x1x256xi32, #tpu.memory_space<vmem>>, %arg4: memref<1x1xf32, #tpu.memory_space<vmem>>, %arg5: memref<1x1xf32, #tpu.memory_space<vmem>>) attributes {dimension_semantics = [#tpu.dimension_semantics<arbitrary>, #tpu.dimension_semantics<arbitrary>], iteration_bounds = array<i64: 2, 1>, scalar_prefetch = 0 : i64, scratch_operands = 1 : i64, tpu.core_type = #tpu.core_type<tc>, window_params = [{transform_indices = @transform_0, window_bounds = array<i64: 1, 4, 256>}, {transform_indices = @transform_1, window_bounds = array<i64: 1, 1, 256>}, {pipeline_mode = #tpu.pipeline_mode<synchronous>, transform_indices = @transform_2, window_bounds = array<i64: 1, 1>}]} {
    %c0_i32 = arith.constant 0 : i32
    %0 = arith.cmpi eq, %arg0, %c0_i32 : i32
    %c0_i32_0 = arith.constant 0 : i32
    %1 = arith.cmpi eq, %arg1, %c0_i32_0 : i32
    %2 = arith.andi %0, %1 : i1
    %c1_i32 = arith.constant 1 : i32
    %3 = arith.cmpi eq, %arg0, %c1_i32 : i32
    %c0_i32_1 = arith.constant 0 : i32
    %4 = arith.cmpi eq, %arg1, %c0_i32_1 : i32
    %5 = arith.andi %3, %4 : i1
    %c0 = arith.constant 0 : index
    %c0_2 = arith.constant 0 : index
    %c0_3 = arith.constant 0 : index
    %6 = vector.load %arg2[%c0, %c0_2, %c0_3] : memref<1x4x256xf32, #tpu.memory_space<vmem>>, vector<1x4x256xf32>
    %7 = vector.shape_cast %6 : vector<1x4x256xf32> to vector<4x256xf32>
    %c0_4 = arith.constant 0 : index
    %c0_5 = arith.constant 0 : index
    %c0_6 = arith.constant 0 : index
    %8 = vector.load %arg3[%c0_4, %c0_5, %c0_6] : memref<1x1x256xi32, #tpu.memory_space<vmem>>, vector<1x1x256xi32>
    %9 = vector.shape_cast %8 : vector<1x1x256xi32> to vector<1x256xi32>
    %cst = arith.constant dense<0xFF800000> : vector<256xf32>
    %10 = vector.multi_reduction <maximumf>, %7, %cst [0] : vector<4x256xf32> to vector<256xf32>
    %11 = vector.shape_cast %10 : vector<256xf32> to vector<1x256xf32>
    %12 = vector.broadcast %11 : vector<1x256xf32> to vector<4x256xf32>
    %13 = arith.subf %7, %12 : vector<4x256xf32>
    %14 = math.exp %13 : vector<4x256xf32>
    %cst_7 = arith.constant dense<0.000000e+00> : vector<256xf32>
    %15 = vector.multi_reduction <add>, %14, %cst_7 [0] : vector<4x256xf32> to vector<256xf32>
    %16 = vector.shape_cast %15 : vector<256xf32> to vector<1x256xf32>
    %17 = math.log %16 : vector<1x256xf32>
    %18 = arith.addf %11, %17 : vector<1x256xf32>
    %19 = tpu.iota {dimensions = array<i32: 0>} : vector<4x256xi32>
    %20 = vector.broadcast %9 : vector<1x256xi32> to vector<4x256xi32>
    %21 = arith.cmpi eq, %19, %20 : vector<4x256xi32>
    %cst_8 = arith.constant 0.000000e+00 : f32
    %22 = vector.broadcast %cst_8 : f32 to vector<4x256xf32>
    %23 = arith.select %21, %7, %22 : vector<4x256xi1>, vector<4x256xf32>
    %cst_9 = arith.constant dense<0.000000e+00> : vector<256xf32>
    %24 = vector.multi_reduction <add>, %23, %cst_9 [0] : vector<4x256xf32> to vector<256xf32>
    %25 = vector.shape_cast %24 : vector<256xf32> to vector<1x256xf32>
    %c0_i32_10 = arith.constant 0 : i32
    %26 = vector.broadcast %c0_i32_10 : i32 to vector<1x256xi32>
    %27 = arith.cmpi sge, %9, %26 : vector<1x256xi32>
    %28 = arith.extui %27 : vector<1x256xi1> to vector<1x256xi32>
    %29 = arith.sitofp %28 : vector<1x256xi32> to vector<1x256xf32>
    %30 = arith.subf %18, %25 : vector<1x256xf32>
    %31 = arith.mulf %30, %29 : vector<1x256xf32>
    %32 = arith.extui %2 : i1 to i32
    %c0_i32_11 = arith.constant 0 : i32
    %33 = arith.cmpi ne, %32, %c0_i32_11 : i32
    scf.if %33 {
      %cst_18 = arith.constant 0.000000e+00 : f32
      %44 = vector.broadcast %cst_18 : f32 to vector<1x1xf32>
      %c0_19 = arith.constant 0 : index
      %c0_20 = arith.constant 0 : index
      %45 = vector.load %arg5[%c0_19, %c0_20] : memref<1x1xf32, #tpu.memory_space<vmem>>, vector<1x1xf32>
      tpu.vector_store %arg5[%c0_19, %c0_20], %44 {strides = array<i32>} : memref<1x1xf32, #tpu.memory_space<vmem>>, vector<1x1xf32>,
    } else {
    }
    %c0_12 = arith.constant 0 : index
    %c0_13 = arith.constant 0 : index
    %34 = vector.load %arg5[%c0_12, %c0_13] : memref<1x1xf32, #tpu.memory_space<vmem>>, vector<1x1xf32>
    %35 = vector.shape_cast %31 : vector<1x256xf32> to vector<1x1x256xf32>
    %cst_14 = arith.constant dense<0.000000e+00> : vector<1xf32>
    %36 = vector.multi_reduction <add>, %35, %cst_14 [1, 2] : vector<1x1x256xf32> to vector<1xf32>
    %37 = vector.shape_cast %36 : vector<1xf32> to vector<1x1x1xf32>
    %38 = vector.extract %37[0, 0, 0] : f32 from vector<1x1x1xf32>
    %39 = vector.broadcast %38 : f32 to vector<1x1xf32>
    %40 = arith.addf %34, %39 : vector<1x1xf32>
    %c0_15 = arith.constant 0 : index
    %c0_16 = arith.constant 0 : index
    %41 = vector.load %arg5[%c0_15, %c0_16] : memref<1x1xf32, #tpu.memory_space<vmem>>, vector<1x1xf32>
    tpu.vector_store %arg5[%c0_15, %c0_16], %40 {strides = array<i32>} : memref<1x1xf32, #tpu.memory_space<vmem>>, vector<1x1xf32>,
    %42 = arith.extui %5 : i1 to i32
    %c0_i32_17 = arith.constant 0 : i32
    %43 = arith.cmpi ne, %42, %c0_i32_17 : i32
    scf.if %43 {
      %c0_18 = arith.constant 0 : index
      %c0_19 = arith.constant 0 : index
      %44 = vector.load %arg5[%c0_18, %c0_19] : memref<1x1xf32, #tpu.memory_space<vmem>>, vector<1x1xf32>
      %cst_20 = arith.constant 5.120000e+02 : f32
      %45 = vector.broadcast %cst_20 : f32 to vector<1x1xf32>
      %46 = arith.divf %44, %45 : vector<1x1xf32>
      %c0_21 = arith.constant 0 : index
      %c0_22 = arith.constant 0 : index
      %47 = vector.load %arg4[%c0_21, %c0_22] : memref<1x1xf32, #tpu.memory_space<vmem>>, vector<1x1xf32>
      tpu.vector_store %arg4[%c0_21, %c0_22], %46 {strides = array<i32>} : memref<1x1xf32, #tpu.memory_space<vmem>>, vector<1x1xf32>,
    } else {
    }
    return
  }
  func.func @transform_0(%arg0: i32, %arg1: i32) -> (i32, i32, i32) {
    %c0_i32 = arith.constant 0 : i32
    %c0_i32_0 = arith.constant 0 : i32
    return %arg0, %c0_i32, %arg1 : i32, i32, i32
  }
  func.func @transform_1(%arg0: i32, %arg1: i32) -> (i32, i32, i32) {
    %c0_i32 = arith.constant 0 : i32
    %c0_i32_0 = arith.constant 0 : i32
    return %arg0, %c0_i32, %arg1 : i32, i32, i32
  }
  func.func @transform_2(%arg0: i32, %arg1: i32) -> (i32, i32) {
    %c0_i32 = arith.constant 0 : i32
    %c0_i32_0 = arith.constant 0 : i32
    %c0_i32_1 = arith.constant 0 : i32
    return %c0_i32, %c0_i32_0 : i32, i32
  }
}

</mosaic_0001>

<llo_original>
// kernel: tpu_custom_call.1
$region0: #{tpu_custom_call.1}
  #allocation0 [shape = 'u32[]', space=smem, size = 0x4, offset = 0x4, fixed_abs, tag = 'smem constant byte address 0x4 - core index']
  #allocation1 [shape = 'u32[144,128]{1,0:T(1,128)}', space=vmem, size = 0x12000, scoped, tag = 'internal scratch']
  #allocation2 [shape = 'f32[1,1]{1,0:T(1,128)}', space=vmem, size = 0x200, scoped, tag = 'scratch operand']
  %s0 = inlined_call_operand.hbm [shape: f32[2,4,256], index: 0, kind: input, shape index: {}]
  %s1 = inlined_call_operand.hbm [shape: s32[2,1,256], index: 1, kind: input, shape index: {}]
  %s2 = inlined_call_operand.hbm [shape: f32[1,1], index: 2, kind: output, shape index: {}]
  %s3 = sld [smem:[#allocation0]]
  $region57: #{tpu_custom_call.1} parent=0
    _
  %s5 = ssub.s32 1, %s3
  %s6 = scalar_select 0, %s5, %s3
  $region1: #{tpu_custom_call.1} parent=0
    #allocation3 [shape = 'u8[8192]{0}', space=vmem, size = 0x2000, scoped, tag = 'input window, operand 0']
    #allocation4 [shape = 's32[2]{0}', space=sflag, size = 0x8, scoped, tag = 'scoped memory for tpu_custom_call.1']
    #allocation5 [shape = 's32[2]{0}', space=sflag, size = 0x8, scoped, tag = 'scoped memory for tpu_custom_call.1']
    #allocation6 [shape = 'u8[2048]{0}', space=vmem, size = 0x800, scoped, tag = 'input window, operand 1']
    #allocation7 [shape = 's32[2]{0}', space=sflag, size = 0x8, scoped, tag = 'scoped memory for tpu_custom_call.1']
    #allocation8 [shape = 'u8[512]{0}', space=vmem, size = 0x400, scoped, tag = 'output window, operand 0, single buffered']
    %7 = vsyncpa [#allocation4], 0
    %s8 = scalar_lea.sflag [#allocation4], 1
    %9 = vsyncpa %s8, 0
    %10 = vsyncpa [#allocation7], 0
    %s11 = scalar_lea.sflag [#allocation7], 1
    %12 = vsyncpa %s11, 0
    %13 = vsyncpa [#allocation5], 0
    loop: start=0, step=1, limit=4
    $region2: #{tpu_custom_call.1} parent=1 // loop_pre_header
      _
    $region3: #{tpu_custom_call.1} parent=1 // loop_header
      %s15 = sphi 0, %s19
      %p16 = scmp.ge.s32.totalorder %s15, 4
      %s22 = sphi 0, %s34
      %s23 = sphi 0, %s30
      %s24 = sphi 0, %s22
      %s25 = sphi 0, %s23
      %s26 = sphi 0, %s24
      %s27 = sphi 0, %s25
      %s39 = sphi 0, %s41
      %s42 = sphi 0, %s39
      %s43 = sphi 0, %s42
      %s59 = sphi 0, %s43
      %s67 = sphi 0, %s69
      %s70 = sphi 0, %s67
      %s71 = sphi 0, %s70
      %s87 = sphi 0, %s71
      %s91 = sphi 0, %s91
      %s93 = sphi 0, %s91
      %s94 = sphi 0, %s93
      %s108 = sphi 0, %s94
    $region4: #{tpu_custom_call.1} parent=1 // loop_header_branch
      %18 = sbr.rel (%p16) target = $region8
    $region5: #{tpu_custom_call.1} parent=1 // loop_body
      %s20 = ssub.s32 %s15, 1
      %s21 = ssub.s32 %s15, 2
      %s28 = sadd.s32 1, %s23
      %p29 = scmp.ge.s32.totalorder %s28, 1
      %s30 = scalar_select %p29, 0, %s28
      %s31 = sadd.s32 1, %s22
      %s32 = scalar_select %p29, %s31, %s22
      %p33 = scmp.ge.s32.totalorder %s32, 2
      %s34 = scalar_select %p33, 0, %s32
      %s35 = ssub.s32 %s22, %s34
      %s36 = ssub.s32 %s23, %s30
      %s37 = sor.u32 %s35, %s36
      %p38 = scmp.eq.s32.totalorder %s37, 0
      %s40 = sadd.s32 %s39, 1
      %s41 = scalar_select %p38, %s39, %s40
      %p44 = pneg %p38
      %p45 = scmp.eq.s32.totalorder %s15, 1
      %p46 = por %p44, %p45
      %p47 = scmp.ne.s32.totalorder %s39, %s42
      %p48 = scmp.eq.s32.totalorder %s15, 0
      %p49 = por %p47, %p48
      %p50 = scmp.ne.s32.totalorder %s39, %s42
      %p51 = scmp.eq.s32.totalorder %s20, 1
      %p52 = por %p50, %p51
      %p53 = scmp.ne.s32.totalorder %s42, %s43
      %p54 = scmp.eq.s32.totalorder %s20, 0
      %p55 = por %p53, %p54
      %p56 = scmp.ne.s32.totalorder %s42, %s43
      %p57 = scmp.eq.s32.totalorder %s21, 1
      %p58 = por %p56, %p57
      %p60 = scmp.ne.s32.totalorder %s43, %s59
      %p61 = scmp.eq.s32.totalorder %s21, 0
      %p62 = por %p60, %p61
      %s63 = ssub.s32 %s22, %s34
      %s64 = ssub.s32 %s23, %s30
      %s65 = sor.u32 %s63, %s64
      %p66 = scmp.eq.s32.totalorder %s65, 0
      %s68 = sadd.s32 %s67, 1
      %s69 = scalar_select %p66, %s67, %s68
      %p72 = pneg %p66
      %p73 = scmp.eq.s32.totalorder %s15, 1
      %p74 = por %p72, %p73
      %p75 = scmp.ne.s32.totalorder %s67, %s70
      %p76 = scmp.eq.s32.totalorder %s15, 0
      %p77 = por %p75, %p76
      %p78 = scmp.ne.s32.totalorder %s67, %s70
      %p79 = scmp.eq.s32.totalorder %s20, 1
      %p80 = por %p78, %p79
      %p81 = scmp.ne.s32.totalorder %s70, %s71
      %p82 = scmp.eq.s32.totalorder %s20, 0
      %p83 = por %p81, %p82
      %p84 = scmp.ne.s32.totalorder %s70, %s71
      %p85 = scmp.eq.s32.totalorder %s21, 1
      %p86 = por %p84, %p85
      %p88 = scmp.ne.s32.totalorder %s71, %s87
      %p89 = scmp.eq.s32.totalorder %s21, 0
      %p90 = por %p88, %p89
      %s92 = sadd.s32 %s91, 1
      %p95 = scmp.eq.s32.totalorder %s15, 1
      %p96 = scmp.ne.s32.totalorder %s91, %s93
      %p97 = scmp.eq.s32.totalorder %s15, 0
      %p98 = por %p96, %p97
      %p99 = scmp.ne.s32.totalorder %s91, %s93
      %p100 = scmp.eq.s32.totalorder %s20, 1
      %p101 = por %p99, %p100
      %p102 = scmp.ne.s32.totalorder %s93, %s94
      %p103 = scmp.eq.s32.totalorder %s20, 0
      %p104 = por %p102, %p103
      %p105 = scmp.ne.s32.totalorder %s93, %s94
      %p106 = scmp.eq.s32.totalorder %s21, 1
      %p107 = por %p105, %p106
      %p109 = scmp.ne.s32.totalorder %s94, %s108
      %p110 = scmp.eq.s32.totalorder %s21, 0
      %p111 = por %p109, %p110
      %p112 = scmp.le.s32.totalorder 1, %s15
      %p113 = scmp.lt.s32.totalorder %s15, 3
      %p114 = pnand %p112, %p113
      %p115 = pneg %p114
      // Predicated region
      $region9: #{tpu_custom_call.1} parent=5 // pred_check
        _
      $region10: #{tpu_custom_call.1} parent=5 // pred_check_branch
        %117 = sbr.rel (%p114) target = $region12
      $region11: #{tpu_custom_call.1} parent=5 // pred_region
        %s118 = ssub.s32 %s15, 1
      $region12: #{tpu_custom_call.1} parent=5 // pred_fallthru
        _
      %p119 = scmp.lt.s32.totalorder %s15, 2
      // Predicated region
      $region13: #{tpu_custom_call.1} parent=5 // pred_check
        %p120 = pneg %p119
      $region14: #{tpu_custom_call.1} parent=5 // pred_check_branch
        %122 = sbr.rel (%p120) target = $region16
      $region15: #{tpu_custom_call.1} parent=5 // pred_region
        // Predicated region
        $region17: #{tpu_custom_call.1} parent=15 // pred_check
          %p123 = pneg %p49
        $region18: #{tpu_custom_call.1} parent=15 // pred_check_branch
          %125 = sbr.rel (%p123) target = $region20
        $region19: #{tpu_custom_call.1} parent=15 // pred_region
          %s126 = sand.u32 %s39, 1
          %s127 = scalar_lea.sflag [#allocation4], %s126
          %s128 = sand.u32 %s39, 1
          %s129 = smul.addr %s128, 8
          %s130 = scalar_lea.vmem [#allocation3], %s129
          %s131 = smul.u32 2, %s23
          %s133 = ssub.s32 128, 128
          %134 = vsyncadd %s127, %s133
          %s135 = smul.addr %s22, 2
          %s136 = sadd.s32 %s131, %s135
          %s137 = smul.addr %s136, 64
          %s138 = scalar_lea.hbm %s0, %s137
          %s140 = sshll.u32 %s130, 4
          %s141 = int_to_ptr.vmem [resolvable:$true] %s140
          %143 = dma.hbm_to_vmem [thread:$0]  %s138, 128, %s141, %s127
        $region20: #{tpu_custom_call.1} parent=15 // pred_fallthru
          _
        // Predicated region
        $region21: #{tpu_custom_call.1} parent=15 // pred_check
          %p144 = pneg %p77
        $region22: #{tpu_custom_call.1} parent=15 // pred_check_branch
          %146 = sbr.rel (%p144) target = $region24
        $region23: #{tpu_custom_call.1} parent=15 // pred_region
          %s147 = sand.u32 %s67, 1
          %s148 = scalar_lea.sflag [#allocation7], %s147
          %s149 = sand.u32 %s67, 1
          %s150 = smul.addr %s149, 2
          %s151 = scalar_lea.vmem [#allocation6], %s150
          %s152 = smul.u32 2, %s23
          %s154 = ssub.s32 32, 32
          %155 = vsyncadd %s148, %s154
          %s156 = smul.addr %s22, 2
          %s157 = sadd.s32 %s152, %s156
          %s158 = smul.addr %s157, 16
          %s159 = scalar_lea.hbm %s1, %s158
          %s161 = sshll.u32 %s151, 4
          %s162 = int_to_ptr.vmem [resolvable:$true] %s161
          %164 = dma.hbm_to_vmem [thread:$0]  %s159, 32, %s162, %s148
        $region24: #{tpu_custom_call.1} parent=15 // pred_fallthru
          _
      $region16: #{tpu_custom_call.1} parent=5 // pred_fallthru
        _
      %p165 = scmp.le.s32.totalorder 1, %s15
      %p166 = scmp.lt.s32.totalorder %s15, 3
      %p167 = pnand %p165, %p166
      %p168 = pneg %p167
      // Predicated region
      $region25: #{tpu_custom_call.1} parent=5 // pred_check
        _
      $region26: #{tpu_custom_call.1} parent=5 // pred_check_branch
        %170 = sbr.rel (%p167) target = $region28
      $region27: #{tpu_custom_call.1} parent=5 // pred_region
        %s171 = ssub.s32 %s15, 1
        %s172 = sand.u32 %s42, 1
        %s173 = scalar_lea.sflag [#allocation4], %s172
        %s174 = sand.u32 %s42, 1
        %s175 = smul.addr %s174, 8
        %s176 = scalar_lea.vmem [#allocation3], %s175
        // Predicated region
        $region29: #{tpu_custom_call.1} parent=27 // pred_check
          %p177 = pneg %p55
        $region30: #{tpu_custom_call.1} parent=27 // pred_check_branch
          %179 = sbr.rel (%p177) target = $region32
        $region31: #{tpu_custom_call.1} parent=27 // pred_region
          %180 = dma.done %s173, 128
        $region32: #{tpu_custom_call.1} parent=27 // pred_fallthru
          _
        %s181 = sand.u32 %s70, 1
        %s182 = scalar_lea.sflag [#allocation7], %s181
        %s183 = sand.u32 %s70, 1
        %s184 = smul.addr %s183, 2
        %s185 = scalar_lea.vmem [#allocation6], %s184
        // Predicated region
        $region33: #{tpu_custom_call.1} parent=27 // pred_check
          %p186 = pneg %p83
        $region34: #{tpu_custom_call.1} parent=27 // pred_check_branch
          %188 = sbr.rel (%p186) target = $region36
        $region35: #{tpu_custom_call.1} parent=27 // pred_region
          %189 = dma.done %s182, 32
        $region36: #{tpu_custom_call.1} parent=27 // pred_fallthru
          _
        %s190 = sand.u32 %s42, 1
        %s191 = scalar_lea.sflag [#allocation4], %s190
        %s192 = sand.u32 %s42, 1
        %s193 = smul.addr %s192, 8
        %s194 = scalar_lea.vmem [#allocation3], %s193
        %p195 = pneg %p55
        %p196 = pneg %p52
        %s197 = sand.u32 %s70, 1
        %s198 = scalar_lea.sflag [#allocation7], %s197
        %s199 = sand.u32 %s70, 1
        %s200 = smul.addr %s199, 2
        %s201 = scalar_lea.vmem [#allocation6], %s200
        %p202 = pneg %p83
        %p203 = pneg %p80
        %p204 = pneg %p104
        %p205 = pneg %p101
        %s206 = smul.u32 2, %s25
        %s207 = smul.u32 2, %s25
        %p208 = scmp.eq.s32.totalorder %s24, 0
        %p209 = scmp.eq.s32.totalorder %s25, 0
        %p210 = pnand %p208, %p209
        %p211 = pneg %p210
        %p212 = scmp.eq.s32.totalorder %s24, 1
        %p213 = pnand %p212, %p209
        %p214 = pneg %p213
        %v215 = vld [vmem:[%s176] sm:$0xff]
        %v216 = vld [vmem:[%s185] sm:$0x3]
        %v218 = vcombine.high %v215, %v215
        %vm220 = vcmask 1043456
        %v221 = vsel %vm220, %v215, -inf
        %v222 = vrot.slane %v221, 4
        %v223 = vmax.f32 %v221, %v222
        %v224 = vrot.slane %v223, 2
        %v225 = vmax.f32 %v223, %v224
        %v226 = vrot.slane %v225, 1
        %v227 = vmax.f32 %v225, %v226
        %v228 = vsel %vm220, %v218, -inf
        %v229 = vrot.slane %v228, 4
        %v230 = vmax.f32 %v228, %v229
        %v231 = vrot.slane %v230, 2
        %v232 = vmax.f32 %v230, %v231
        %v233 = vrot.slane %v232, 1
        %v234 = vmax.f32 %v232, %v233
        %v237 = vcombine.low %v227, %v234
        %v239 = vsub.f32 %v215, %v237
        %v240 = vmul.f32 %v239, 1.442695
        %v241 = vpow.pop %v240
        %v243 = vcombine.high %v241, %v241
        %v245 = vsel %vm220, %v241, 0.0
        %v246 = vrot.slane %v245, 4
        %v247 = vadd.f32 %v245, %v246
        %v248 = vrot.slane %v247, 2
        %v249 = vadd.f32 %v247, %v248
        %v250 = vrot.slane %v249, 1
        %v251 = vadd.f32 %v249, %v250
        %v252 = vsel %vm220, %v243, 0.0
        %v253 = vrot.slane %v252, 4
        %v254 = vadd.f32 %v252, %v253
        %v255 = vrot.slane %v254, 2
        %v256 = vadd.f32 %v254, %v255
        %v257 = vrot.slane %v256, 1
        %v258 = vadd.f32 %v256, %v257
        %v259 = vlog2.pop %v251
        %v260 = vmul.f32 %v259, 0.6931472
        %v261 = vlog2.pop %v258
        %v262 = vmul.f32 %v261, 0.6931472
        %v263 = vadd.f32 %v227, %v260
        %v264 = vadd.f32 %v234, %v262
        %v265 = vlaneseq
        %v266 = vshrl.u32 %v265, 7
        %v267 = vlaneseq
        %v268 = vshrl.u32 %v267, 7
        %v269 = vsub.s32 0, %v268
        %v270 = vrot.slane %v216, %v269
        %v271 = vlaneseq
        %v272 = vshrl.u32 %v271, 7
        %v273 = vsub.s32 1, %v272
        %v274 = vrot.slane %v216, %v273
        %vm275 = vcmp.eq.s32.totalorder %v266, %v270
        %vm276 = vcmp.eq.s32.totalorder %v266, %v274
        %v277 = vsel %vm275, %v215, 0.0
        %v278 = vsel %vm276, %v218, 0.0
        %v279 = vsel %vm220, %v277, 0.0
        %v280 = vrot.slane %v279, 4
        %v281 = vadd.f32 %v279, %v280
        %v282 = vrot.slane %v281, 2
        %v283 = vadd.f32 %v281, %v282
        %v284 = vrot.slane %v283, 1
        %v285 = vadd.f32 %v283, %v284
        %v286 = vsel %vm220, %v278, 0.0
        %v287 = vrot.slane %v286, 4
        %v288 = vadd.f32 %v286, %v287
        %v289 = vrot.slane %v288, 2
        %v290 = vadd.f32 %v288, %v289
        %v291 = vrot.slane %v290, 1
        %v292 = vadd.f32 %v290, %v291
        %vm293 = vcmp.ge.s32.totalorder %v216, 0
        %v294 = vsel %vm293, 1, 0
        %v295 = vcvt.s32.f32 %v294
        %v296 = vsub.f32 %v263, %v285
        %v297 = vsub.f32 %v264, %v292
        %v299 = vlaneseq
        %v300 = vshrl.u32 %v299, 7
        %v301 = vsub.s32 0, %v300
        %v302 = vrot.slane %v295, %v301
        %v303 = vlaneseq
        %v304 = vshrl.u32 %v303, 7
        %v305 = vsub.s32 1, %v304
        %v306 = vrot.slane %v295, %v305
        %v309 = vmul.f32 %v296, %v302
        %v310 = vmul.f32 %v297, %v306
        // Predicated region
        $region37: #{tpu_custom_call.1} parent=27 // pred_check
          _
        $region38: #{tpu_custom_call.1} parent=27 // pred_check_branch
          %312 = sbr.rel (%p210) target = $region40
        $region39: #{tpu_custom_call.1} parent=27 // pred_region
          %vm313 = vcmask 0
          %314 = vst.msk [vmem:[#allocation2] sm:$0x1] %vm313, 0.0
        $region40: #{tpu_custom_call.1} parent=27 // pred_fallthru
          _
        %v315 = vld [vmem:[#allocation2] sm:$0x1]
        %vm316 = vcmask 1040384
        %v317 = vsel %vm316, %v309, 0.0
        %v318 = vsel %vm316, %v310, 0.0
        %v319 = vadd.f32 %v317, %v318
        %320 = vadd.xlane.f32.xlu0 %v319
        %v321 = vpop.xlane.xlu0 %320
        %v322 = vrot.slane %v321, 4
        %v323 = vadd.f32 %v321, %v322
        %v324 = vrot.slane %v323, 2
        %v325 = vadd.f32 %v323, %v324
        %v326 = vrot.slane %v325, 1
        %v327 = vadd.f32 %v325, %v326
        %s328 = vtos %v327
        %v329 = vstv %s328
        %v330 = vadd.f32 %v315, %v329
        %vm331 = vcmask 0
        %332 = vst.msk [vmem:[#allocation2] sm:$0x1] %vm331, %v330
        // Predicated region
        $region41: #{tpu_custom_call.1} parent=27 // pred_check
          _
        $region42: #{tpu_custom_call.1} parent=27 // pred_check_branch
          %334 = sbr.rel (%p213) target = $region44
        $region43: #{tpu_custom_call.1} parent=27 // pred_region
          %v335 = vld [vmem:[#allocation2] sm:$0x1]
          %v336 = vrcp.pop 512.0
          %v337 = vmul.f32 %v335, %v336
          %338 = vst.msk [vmem:[#allocation8] sm:$0x1] %vm331, %v337
        $region44: #{tpu_custom_call.1} parent=27 // pred_fallthru
          _
        // Predicated region
        $region45: #{tpu_custom_call.1} parent=27 // pred_check
          %p339 = pneg %p101
        $region46: #{tpu_custom_call.1} parent=27 // pred_check_branch
          %341 = sbr.rel (%p339) target = $region48
        $region47: #{tpu_custom_call.1} parent=27 // pred_region
          %s343 = ssub.s32 16, 16
          %344 = vsyncadd [#allocation5], %s343
          %s346 = sshll.u32 [#allocation8], 4
          %s347 = int_to_ptr.vmem [resolvable:$true] %s346
          %349 = dma.vmem_to_hbm [thread:$0]  %s347, 16, %s2, [#allocation5]
        $region48: #{tpu_custom_call.1} parent=27 // pred_fallthru
          _
        // Predicated region
        $region49: #{tpu_custom_call.1} parent=27 // pred_check
          %p350 = pneg %p101
        $region50: #{tpu_custom_call.1} parent=27 // pred_check_branch
          %352 = sbr.rel (%p350) target = $region52
        $region51: #{tpu_custom_call.1} parent=27 // pred_region
          %353 = dma.done [#allocation5], 16
        $region52: #{tpu_custom_call.1} parent=27 // pred_fallthru
          _
      $region28: #{tpu_custom_call.1} parent=5 // pred_fallthru
        _
      %p354 = scmp.le.s32.totalorder 2, %s15
      // Predicated region
      $region53: #{tpu_custom_call.1} parent=5 // pred_check
        %p355 = pneg %p354
      $region54: #{tpu_custom_call.1} parent=5 // pred_check_branch
        %357 = sbr.rel (%p355) target = $region56
      $region55: #{tpu_custom_call.1} parent=5 // pred_region
        %s358 = ssub.s32 %s15, 2
      $region56: #{tpu_custom_call.1} parent=5 // pred_fallthru
        _
    $region6: #{tpu_custom_call.1} parent=1 // loop_footer
      %s19 = sadd.s32 1, %s15
    $region7: #{tpu_custom_call.1} parent=1 // loop_footer_branch
      %14 = sbr.rel target = $region3
    $region8: #{tpu_custom_call.1} parent=1 // loop_exit
      _
    %359 = vsyncpa [#allocation4], 1
    %s360 = scalar_lea.sflag [#allocation4], 1
    %361 = vsyncpa %s360, 1
    %362 = vsyncpa [#allocation7], 1
    %s363 = scalar_lea.sflag [#allocation7], 1
    %364 = vsyncpa %s363, 1
    %365 = vsyncpa [#allocation5], 1
    %s366 = scalar_lea.sflag [#allocation5], 1
    %367 = vsyncpa %s366, 1

</llo_original>
